<compile_context>
chip_gen: v7x
topology: tpu7x:2x2x1
jax: 0.10.0
libtpu: 0.0.40
codegen_flags: <defaults>
</compile_context>

<pallas_src>
import jax
import jax.numpy as jnp
from jax.experimental import pallas as pl
from jax.experimental.pallas import tpu as pltpu


def attention_fusion_kernel(v1_ref, v2_ref, w_ref, out_ref):
    # v1_ref / v2_ref / out_ref: (TB, D) tile; w_ref: (1, D) resident f32 weight.
    v1 = v1_ref[...]
    v2 = v2_ref[...]
    w = w_ref[...]                                     # (1, D) f32, broadcast over rows

    # Linear(D -> 1, no bias): lane reduction. w is f32, so products and the
    # accumulation happen in f32 even for bf16 inputs (only (TB,1) kept).
    s1 = jnp.sum(v1 * w, axis=-1, keepdims=True)       # (TB, 1) f32
    s2 = jnp.sum(v2 * w, axis=-1, keepdims=True)       # (TB, 1) f32

    # Exact 2-way softmax: a1 = exp(s1)/(exp(s1)+exp(s2)) = 1/(1+exp(s2-s1)).
    # Overflow-safe: exp(+inf-ish) -> inf -> a1 -> 0 (matches softmax limit).
    a1 = 1.0 / (1.0 + jnp.exp(s2 - s1))                # (TB, 1) f32
    a2 = 1.0 - a1                                      # (TB, 1) f32

    # Blend with f32 attention weights (products promote to f32); cast once at
    # the end to the output dtype.
    out_ref[...] = (a1 * v1 + a2 * v2).astype(out_ref.dtype)


def _round_up8(x):
    return -(-x // 8) * 8


def _vmem_plan():
    """(streamed_budget_bytes, vmem_limit_cap_bytes), chip-aware if possible."""
    budget, cap = 24 << 20, 44 << 20                   # safe on every generation
    try:
        vmem = pltpu.get_tpu_info().vmem_capacity_bytes
        if vmem >= (100 << 20):                        # v5e / v6e: 128 MiB physical
            budget, cap = 40 << 20, 72 << 20
        else:                                          # v7x: 64 MiB physical per TC
            budget, cap = 28 << 20, 48 << 20
    except Exception:
        pass                                           # interpret / unknown backend
    return budget, cap


def _choose_tile_b(B, D, itemsize, stream_budget):
    """Largest batch tile fitting the double-buffered streamed-VMEM budget.

    Streamed traffic per step: v1, v2, out tiles x 2 pipeline buffers each.
    The whole batch is kept in one block when it fits; it is split into two
    blocks only when each half still moves >= ~2 MiB per stream, so v7x's
    second TensorCore is not left idle (single-TC chips pay one extra step).
    """
    bytes_per_row = 3 * 2 * D * itemsize
    fit = max(8, (stream_budget // bytes_per_row) // 8 * 8)
    min_split_rows = max(8, _round_up8((2 << 20) // (D * itemsize)))
    if B <= fit:
        if B >= 2 * min_split_rows:
            return _round_up8(-(-B // 2))              # 2 tiles, both >= ~2 MiB/stream
        return B                                       # one full-extent block (legal even if B % 8 != 0)
    return fit                                         # multiple tiles, ragged tail handled by Pallas


def attention_fusion(v1, v2, w, *, tile_b=None):
    """v1, v2: (B, D); w: (1, D) Linear(D->1, bias=False) weight. Returns (B, D)."""
    B, D = v1.shape
    assert v2.shape == (B, D)
    w_f32 = jnp.asarray(w, dtype=jnp.float32).reshape(1, D)

    itemsize = jnp.dtype(v1.dtype).itemsize
    stream_budget, vmem_cap = _vmem_plan()
    if tile_b is None:
        tile_b = _choose_tile_b(B, D, itemsize, stream_budget)
    num_tiles = pl.cdiv(B, tile_b)                     # ragged last block: no wrapper padding

    streamed_bytes = 3 * 2 * tile_b * D * itemsize     # v1/v2/out, double-buffered
    vmem_limit = int(min(vmem_cap, streamed_bytes + (16 << 20)))  # + f32 temps / weight headroom

    return pl.pallas_call(
        attention_fusion_kernel,
        out_shape=jax.ShapeDtypeStruct((B, D), v1.dtype),
        grid_spec=pltpu.PrefetchScalarGridSpec(
            num_scalar_prefetch=0,
            grid=(num_tiles,),
            in_specs=[
                pl.BlockSpec((tile_b, D), lambda i: (i, 0)),   # v1 tile
                pl.BlockSpec((tile_b, D), lambda i: (i, 0)),   # v2 tile
                pl.BlockSpec((1, D), lambda i: (0, 0)),        # weight (resident)
            ],
            out_specs=pl.BlockSpec((tile_b, D), lambda i: (i, 0)),
        ),
        compiler_params=pltpu.CompilerParams(
            dimension_semantics=("parallel",),          # shards batch grid across v7x's 2 TCs
            vmem_limit_bytes=vmem_limit,
        ),
    )(v1, v2, w_f32)


def attention_fusion_ref(v1, v2, w):
    # Pure-JAX reference matching the PyTorch forward.
    stacked = jnp.stack([v1, v2], axis=1)                       # (B, 2, D)
    scores = jnp.einsum("bsd,od->bso", stacked, w)[..., 0]      # (B, 2)
    attn = jax.nn.softmax(scores, axis=1)
    return attn[:, 0:1] * v1 + attn[:, 1:2] * v2


if __name__ == "__main__":
    # Small demo shapes consistent with the module (input_dim defaults to 512).
    B, D = 8, 512

    key = jax.random.PRNGKey(0)
    k1, k2, kw = jax.random.split(key, 3)
    v1 = jax.random.normal(k1, (B, D), dtype=jnp.float32)
    v2 = jax.random.normal(k2, (B, D), dtype=jnp.float32)
    # Deterministic init for nn.Linear(D, 1, bias=False): weight shape (1, D).
    w = jax.random.normal(kw, (1, D), dtype=jnp.float32) * (1.0 / jnp.sqrt(D))

    out = jax.block_until_ready(attention_fusion(v1, v2, w))
    ref = attention_fusion_ref(v1, v2, w)
    assert out.shape == (B, D)
    assert jnp.allclose(out, ref, atol=1e-4, rtol=1e-4)

    # Ragged multi-tile path (B not a multiple of tile_b, no wrapper padding).
    B2 = 300
    v1b = jax.random.normal(k1, (B2, D), dtype=jnp.float32)
    v2b = jax.random.normal(k2, (B2, D), dtype=jnp.float32)
    ref2 = attention_fusion_ref(v1b, v2b, w)
    out2 = jax.block_until_ready(attention_fusion(v1b, v2b, w, tile_b=128))
    assert out2.shape == (B2, D)
    assert jnp.allclose(out2, ref2, atol=1e-4, rtol=1e-4)

    # Auto-tiled path (single full-extent block with B % 8 != 0).
    out3 = jax.block_until_ready(attention_fusion(v1b, v2b, w))
    assert jnp.allclose(out3, ref2, atol=1e-4, rtol=1e-4)

    print("KERNEL_OK")
</pallas_src>

<mosaic_0001>
module attributes {stable_mosaic.version = 11 : i64} {
  func.func @attention_fusion_kernel(%arg0: i32, %arg1: memref<8x512xf32, #tpu.memory_space<vmem>>, %arg2: memref<8x512xf32, #tpu.memory_space<vmem>>, %arg3: memref<1x512xf32, #tpu.memory_space<vmem>>, %arg4: memref<8x512xf32, #tpu.memory_space<vmem>>) attributes {dimension_semantics = [#tpu.dimension_semantics<parallel>], iteration_bounds = array<i64: 1>, scalar_prefetch = 0 : i64, scratch_operands = 0 : i64, tpu.core_type = #tpu.core_type<tc>, window_params = [{transform_indices = @transform_0, window_bounds = array<i64: 8, 512>}, {transform_indices = @transform_1, window_bounds = array<i64: 8, 512>}, {pipeline_mode = #tpu.pipeline_mode<synchronous>, transform_indices = @transform_2, window_bounds = array<i64: 1, 512>}, {transform_indices = @transform_3, window_bounds = array<i64: 8, 512>}]} {
    %c0 = arith.constant 0 : index
    %c0_0 = arith.constant 0 : index
    %0 = vector.load %arg1[%c0, %c0_0] : memref<8x512xf32, #tpu.memory_space<vmem>>, vector<8x512xf32>
    %c0_1 = arith.constant 0 : index
    %c0_2 = arith.constant 0 : index
    %1 = vector.load %arg2[%c0_1, %c0_2] : memref<8x512xf32, #tpu.memory_space<vmem>>, vector<8x512xf32>
    %c0_3 = arith.constant 0 : index
    %c0_4 = arith.constant 0 : index
    %2 = vector.load %arg3[%c0_3, %c0_4] : memref<1x512xf32, #tpu.memory_space<vmem>>, vector<1x512xf32>
    %3 = vector.broadcast %2 : vector<1x512xf32> to vector<8x512xf32>
    %4 = arith.mulf %0, %3 : vector<8x512xf32>
    %cst = arith.constant dense<0.000000e+00> : vector<8xf32>
    %5 = vector.multi_reduction <add>, %4, %cst [1] : vector<8x512xf32> to vector<8xf32>
    %6 = vector.shape_cast %5 : vector<8xf32> to vector<8x1xf32>
    %7 = vector.broadcast %2 : vector<1x512xf32> to vector<8x512xf32>
    %8 = arith.mulf %1, %7 : vector<8x512xf32>
    %cst_5 = arith.constant dense<0.000000e+00> : vector<8xf32>
    %9 = vector.multi_reduction <add>, %8, %cst_5 [1] : vector<8x512xf32> to vector<8xf32>
    %10 = vector.shape_cast %9 : vector<8xf32> to vector<8x1xf32>
    %11 = arith.subf %10, %6 : vector<8x1xf32>
    %12 = math.exp %11 : vector<8x1xf32>
    %cst_6 = arith.constant 1.000000e+00 : f32
    %13 = vector.broadcast %cst_6 : f32 to vector<8x1xf32>
    %14 = arith.addf %13, %12 : vector<8x1xf32>
    %cst_7 = arith.constant 1.000000e+00 : f32
    %15 = vector.broadcast %cst_7 : f32 to vector<8x1xf32>
    %16 = arith.divf %15, %14 : vector<8x1xf32>
    %cst_8 = arith.constant 1.000000e+00 : f32
    %17 = vector.broadcast %cst_8 : f32 to vector<8x1xf32>
    %18 = arith.subf %17, %16 : vector<8x1xf32>
    %19 = vector.broadcast %16 : vector<8x1xf32> to vector<8x512xf32>
    %20 = arith.mulf %19, %0 : vector<8x512xf32>
    %21 = vector.broadcast %18 : vector<8x1xf32> to vector<8x512xf32>
    %22 = arith.mulf %21, %1 : vector<8x512xf32>
    %23 = arith.addf %20, %22 : vector<8x512xf32>
    %c0_9 = arith.constant 0 : index
    %c0_10 = arith.constant 0 : index
    %24 = vector.load %arg4[%c0_9, %c0_10] : memref<8x512xf32, #tpu.memory_space<vmem>>, vector<8x512xf32>
    tpu.vector_store %arg4[%c0_9, %c0_10], %23 {strides = array<i32>} : memref<8x512xf32, #tpu.memory_space<vmem>>, vector<8x512xf32>,
    return
  }
  func.func @transform_0(%arg0: i32) -> (i32, i32) {
    %c0_i32 = arith.constant 0 : i32
    %c0_i32_0 = arith.constant 0 : i32
    return %arg0, %c0_i32 : i32, i32
  }
  func.func @transform_1(%arg0: i32) -> (i32, i32) {
    %c0_i32 = arith.constant 0 : i32
    %c0_i32_0 = arith.constant 0 : i32
    return %arg0, %c0_i32 : i32, i32
  }
  func.func @transform_2(%arg0: i32) -> (i32, i32) {
    %c0_i32 = arith.constant 0 : i32
    %c0_i32_0 = arith.constant 0 : i32
    %c0_i32_1 = arith.constant 0 : i32
    return %c0_i32, %c0_i32_0 : i32, i32
  }
  func.func @transform_3(%arg0: i32) -> (i32, i32) {
    %c0_i32 = arith.constant 0 : i32
    %c0_i32_0 = arith.constant 0 : i32
    return %arg0, %c0_i32 : i32, i32
  }
}

</mosaic_0001>

<llo_original>
// kernel: tpu_custom_call.1
$region0: #{tpu_custom_call.1}
  #allocation0 [shape = 'u32[]', space=smem, size = 0x4, offset = 0x4, fixed_abs, tag = 'smem constant byte address 0x4 - core index']
  #allocation1 [shape = 'u32[144,128]{1,0:T(1,128)}', space=vmem, size = 0x12000, scoped, tag = 'internal scratch']
  %s0 = inlined_call_operand.hbm [shape: f32[8,512], index: 0, kind: input, shape index: {}]
  %s1 = inlined_call_operand.hbm [shape: f32[8,512], index: 1, kind: input, shape index: {}]
  %s2 = inlined_call_operand.vmem [shape: f32[1,512], index: 2, kind: input, shape index: {}]
  %s3 = inlined_call_operand.hbm [shape: f32[8,512], index: 3, kind: output, shape index: {}]
  %s4 = sld [smem:[#allocation0]]
  $region30: #{tpu_custom_call.1} parent=0
    _
  %s6 = ssub.s32 1, %s4
  %s7 = scalar_select 0, %s6, %s4
  $region1: #{tpu_custom_call.1} parent=0
    #allocation2 [shape = 'u8[16384]{0}', space=vmem, size = 0x4000, scoped, tag = 'input window, operand 0, single buffered']
    #allocation3 [shape = 's32[1]{0}', space=sflag, size = 0x4, scoped, tag = 'scoped memory for tpu_custom_call.1']
    #allocation4 [shape = 's32[1]{0}', space=sflag, size = 0x4, scoped, tag = 'scoped memory for tpu_custom_call.1']
    #allocation5 [shape = 'u8[16384]{0}', space=vmem, size = 0x4000, scoped, tag = 'input window, operand 1, single buffered']
    #allocation6 [shape = 's32[1]{0}', space=sflag, size = 0x4, scoped, tag = 'scoped memory for tpu_custom_call.1']
    #allocation7 [shape = 'u8[16384]{0}', space=vmem, size = 0x4000, scoped, tag = 'output window, operand 0, single buffered']
    %8 = vsyncpa [#allocation3], 0
    %9 = vsyncpa [#allocation6], 0
    %10 = vsyncpa [#allocation4], 0
    // Predicated region
    $region2: #{tpu_custom_call.1} parent=1 // pred_check
      _
    $region3: #{tpu_custom_call.1} parent=1 // pred_check_branch
      %12 = sbr.rel (0) target = $region5
    $region4: #{tpu_custom_call.1} parent=1 // pred_region
      %s14 = ssub.s32 512, 512
      %15 = vsyncadd [#allocation3], %s14
      %s17 = sshll.u32 [#allocation2], 4
      %s18 = int_to_ptr.vmem [resolvable:$true] %s17
      %20 = dma.hbm_to_vmem [thread:$0]  %s0, 512, %s18, [#allocation3]
    $region5: #{tpu_custom_call.1} parent=1 // pred_fallthru
      _
    // Predicated region
    $region6: #{tpu_custom_call.1} parent=1 // pred_check
      _
    $region7: #{tpu_custom_call.1} parent=1 // pred_check_branch
      %22 = sbr.rel (0) target = $region9
    $region8: #{tpu_custom_call.1} parent=1 // pred_region
      %s24 = ssub.s32 512, 512
      %25 = vsyncadd [#allocation6], %s24
      %s27 = sshll.u32 [#allocation5], 4
      %s28 = int_to_ptr.vmem [resolvable:$true] %s27
      %30 = dma.hbm_to_vmem [thread:$0]  %s1, 512, %s28, [#allocation6]
    $region9: #{tpu_custom_call.1} parent=1 // pred_fallthru
      _
    // Predicated region
    $region10: #{tpu_custom_call.1} parent=1 // pred_check
      _
    $region11: #{tpu_custom_call.1} parent=1 // pred_check_branch
      %32 = sbr.rel (0) target = $region13
    $region12: #{tpu_custom_call.1} parent=1 // pred_region
      _
    $region13: #{tpu_custom_call.1} parent=1 // pred_fallthru
      _
    // Predicated region
    $region14: #{tpu_custom_call.1} parent=1 // pred_check
      _
    $region15: #{tpu_custom_call.1} parent=1 // pred_check_branch
      %34 = sbr.rel (0) target = $region17
    $region16: #{tpu_custom_call.1} parent=1 // pred_region
      %35 = dma.done [#allocation3], 512
    $region17: #{tpu_custom_call.1} parent=1 // pred_fallthru
      _
    // Predicated region
    $region18: #{tpu_custom_call.1} parent=1 // pred_check
      _
    $region19: #{tpu_custom_call.1} parent=1 // pred_check_branch
      %37 = sbr.rel (0) target = $region21
    $region20: #{tpu_custom_call.1} parent=1 // pred_region
      %38 = dma.done [#allocation6], 512
    $region21: #{tpu_custom_call.1} parent=1 // pred_fallthru
      _
    %v39 = vld [vmem:[#allocation2] sm:$0xff]
    %v40 = vld [vmem:[#allocation2 + $0x8] sm:$0xff]
    %v41 = vld [vmem:[#allocation2 + $0x10] sm:$0xff]
    %v42 = vld [vmem:[#allocation2 + $0x18] sm:$0xff]
    %v43 = vld [vmem:[#allocation5] sm:$0xff]
    %v44 = vld [vmem:[#allocation5 + $0x8] sm:$0xff]
    %v45 = vld [vmem:[#allocation5 + $0x10] sm:$0xff]
    %v46 = vld [vmem:[#allocation5 + $0x18] sm:$0xff]
    %v47 = vld [vmem:[%s2] sm:$0xf]
    %v49 = vlaneseq
    %v50 = vshrl.u32 %v49, 7
    %v51 = vsub.s32 0, %v50
    %v52 = vrot.slane %v47, %v51
    %v53 = vlaneseq
    %v54 = vshrl.u32 %v53, 7
    %v55 = vsub.s32 1, %v54
    %v56 = vrot.slane %v47, %v55
    %v57 = vlaneseq
    %v58 = vshrl.u32 %v57, 7
    %v59 = vsub.s32 2, %v58
    %v60 = vrot.slane %v47, %v59
    %v61 = vlaneseq
    %v62 = vshrl.u32 %v61, 7
    %v63 = vsub.s32 3, %v62
    %v64 = vrot.slane %v47, %v63
    %v69 = vmul.f32 %v39, %v52
    %v70 = vmul.f32 %v40, %v56
    %v71 = vmul.f32 %v41, %v60
    %v72 = vmul.f32 %v42, %v64
    %v73 = vadd.f32 %v69, %v70
    %v74 = vadd.f32 %v73, %v71
    %v75 = vadd.f32 %v74, %v72
    %76 = vadd.xlane.f32.xlu0 %v75
    %v77 = vpop.xlane.xlu0 %76
    %v78 = vmul.f32 %v43, %v52
    %v79 = vmul.f32 %v44, %v56
    %v80 = vmul.f32 %v45, %v60
    %v81 = vmul.f32 %v46, %v64
    %v82 = vadd.f32 %v78, %v79
    %v83 = vadd.f32 %v82, %v80
    %v84 = vadd.f32 %v83, %v81
    %85 = vadd.xlane.f32.xlu0 %v84
    %v86 = vpop.xlane.xlu0 %85
    %v87 = vsub.f32 %v86, %v77
    %v88 = vmul.f32 %v87, 1.442695
    %v89 = vpow.pop %v88
    %v90 = vadd.f32 %v89, 1.0
    %v91 = vrcp.pop %v90
    %v92 = vmul.f32 1.0, %v91
    %v93 = vsub.f32 1.0, %v92
    %v94 = vmul.f32 %v92, %v39
    %v95 = vmul.f32 %v92, %v40
    %v96 = vmul.f32 %v92, %v41
    %v97 = vmul.f32 %v92, %v42
    %v98 = vmul.f32 %v93, %v43
    %v99 = vmul.f32 %v93, %v44
    %v100 = vmul.f32 %v93, %v45
    %v101 = vmul.f32 %v93, %v46
    %v102 = vadd.f32 %v94, %v98
    %v103 = vadd.f32 %v95, %v99
    %v104 = vadd.f32 %v96, %v100
    %v105 = vadd.f32 %v97, %v101
    %106 = vst [vmem:[#allocation7] sm:$0xff] %v102
    %107 = vst [vmem:[#allocation7 + $0x8] sm:$0xff] %v103
    %108 = vst [vmem:[#allocation7 + $0x10] sm:$0xff] %v104
    %109 = vst [vmem:[#allocation7 + $0x18] sm:$0xff] %v105
    // Predicated region
    $region22: #{tpu_custom_call.1} parent=1 // pred_check
      _
    $region23: #{tpu_custom_call.1} parent=1 // pred_check_branch
      %111 = sbr.rel (0) target = $region25
    $region24: #{tpu_custom_call.1} parent=1 // pred_region
      %s113 = ssub.s32 512, 512
      %114 = vsyncadd [#allocation4], %s113
      %s116 = sshll.u32 [#allocation7], 4
      %s117 = int_to_ptr.vmem [resolvable:$true] %s116
      %119 = dma.vmem_to_hbm [thread:$0]  %s117, 512, %s3, [#allocation4]
    $region25: #{tpu_custom_call.1} parent=1 // pred_fallthru
      _
    // Predicated region
    $region26: #{tpu_custom_call.1} parent=1 // pred_check
      _
    $region27: #{tpu_custom_call.1} parent=1 // pred_check_branch
      %121 = sbr.rel (0) target = $region29
    $region28: #{tpu_custom_call.1} parent=1 // pred_region
      %122 = dma.done [#allocation4], 512
    $region29: #{tpu_custom_call.1} parent=1 // pred_fallthru
      _
    %123 = vsyncpa [#allocation3], 1
    %124 = vsyncpa [#allocation6], 1
    %125 = vsyncpa [#allocation4], 1

</llo_original>
